<compile_context>
chip_gen: v5e
topology: v5e:2x2
jax: 0.10.0
libtpu: 0.0.40
codegen_flags: <defaults>
</compile_context>

<pallas_src>
import math

import jax
import jax.numpy as jnp
from jax.experimental import pallas as pl
from jax.experimental.pallas import tpu as pltpu

# --- small, module-consistent hyperparameters ---
B = 2
LATENT_DIM = 32            # latent_dim
HIDDEN = 64                # hidden_size
DEPTH = 0                  # depth -> range(depth-2) empty, no trunk resnet blocks
MT_LATENT = 16             # motion_template_latent_dim

FEATURES = {
    "rotation":      {"out_dim": 4, "groups": 8},
    "canonical_loc": {"out_dim": 3, "groups": 8, "is_const": True, "quantize_num": 6},
}
OUT_CONV_SCALES = {"rotation": 0.5, "canonical_loc": 2.0}

G = FEATURES["canonical_loc"]["groups"]            # 8
QN = FEATURES["canonical_loc"]["quantize_num"]     # 6
GQ = G * QN                                        # 48
CHD = HIDDEN // G                                  # const_hidden_dim = 8
# AttentionEncoderFromSpec schedule: idx=0 -> size_out=4 (>3, keep), idx=1 -> 2 (<=3, stop)
BLK_IN, BLK_H, BLK_OUT = CHD, CHD // 2, CHD // 2   # 8, 4, 4
CL_OUT = FEATURES["canonical_loc"]["out_dim"]      # 3
ROT_G = FEATURES["rotation"]["groups"]             # 8
ROT_D = FEATURES["rotation"]["out_dim"]            # 4

LEAKY = 0.2
INV_SQRT_D = 1.0 / math.sqrt(CHD)
OUT_LANES = 128                                    # merged lane-dense output width

# --- packed weight-slab row offsets (all (8,128)-aligned pieces, width 128) ---
R_W1 = 0          # (32, 64)   trunk conv1d
R_WD = 32         # (16, 48)   mt -> centered attention logits (fully folded)
R_WV = 48         # (48, 128)  [mem_bd | segH]  value + deferred denominator
R_W0 = 96         # (64, 32)   groupwise resblock fc_0 (block-diag)
R_WS = 160        # (64, 32)   groupwise resblock shortcut (block-diag)
R_W1R = 224       # (32, 32)   groupwise resblock fc_1 (block-diag)
R_WROT = 256      # (64, 128)  rotation head (lanes 0:32), scale folded
R_WCL = 320       # (32, 128)  canonical_loc head (lanes 32:56), scale folded
R_B1, R_BD, R_B0, R_B1R, R_BOUT = 352, 353, 354, 355, 356   # bias rows
SLAB_ROWS = 360


def _vmem():
    return pl.BlockSpec(memory_space=pltpu.MemorySpace.VMEM)


# ----------------- single fused Pallas kernel -----------------
#
# TODO(synk): layers.AttentionConstMemory source was not provided; implemented as
# canonical attention-over-learned-memory: q = Linear(z); softmax(q.mem^T/sqrt(d)) @ mem.
# TODO(synk): GroupWiseResnetBlockConv1d source was not provided; implemented as the
# occupancy-networks ResnetBlockConv1d (ReLU, fc_0/fc_1 + bias-free shortcut) per group.
# NOTE on the softmax shift: the per-group MEAN is subtracted (folded into the logits
# matmul at pack time).  This is exact for softmax and guarantees denom >= 1 so the
# deferred normalization can never divide by zero; at these weight scales
# |logit - mean| << 88 so exp() cannot overflow.  A per-group MAX shift would need a
# cross-lane segmented reduce and only differs for pathological logit magnitudes.
def _fused_kernel(in_ref, mt_ref, w_ref, out_ref):
    f32 = jnp.float32

    # ---- trunk conv1d (L=1 => matmul); depth=0 => no trunk resnet blocks ----
    x = (jnp.dot(in_ref[...], w_ref[R_W1:R_W1 + LATENT_DIM, :HIDDEN],
                 preferred_element_type=f32)
         + w_ref[R_B1:R_B1 + 1, :HIDDEN])                                     # (B, 64)
    xa = jnp.where(x >= 0, x, LEAKY * x)                                      # act(x)

    # ---- const head "canonical_loc": AttentionConstMemory, fully folded ----
    # centered logits (query matmul, 1/sqrt(d) and per-group mean pre-folded)
    d = (jnp.dot(mt_ref[...], w_ref[R_WD:R_WD + MT_LATENT, :GQ],
                 preferred_element_type=f32)
         + w_ref[R_BD:R_BD + 1, :GQ])                                         # (B, 48)
    p = jnp.exp(d)
    # one 128-lane push: un-normalized context (lanes 0:64) + per-group denom (64:128)
    hc = jnp.dot(p, w_ref[R_WV:R_WV + GQ, :], preferred_element_type=f32)     # (B, 128)
    h = hc[:, :HIDDEN] * pl.reciprocal(hc[:, HIDDEN:], approx=True)           # (B, 64)

    # ---- GroupWiseResnetBlockConv1d (8 -> 4 per group), block-diagonal ----
    hr = jnp.maximum(h, 0.0)
    net = jnp.maximum(
        jnp.dot(hr, w_ref[R_W0:R_W0 + HIDDEN, :G * BLK_H],
                preferred_element_type=f32)
        + w_ref[R_B0:R_B0 + 1, :G * BLK_H], 0.0)                              # (B, 32)
    xs = jnp.dot(h, w_ref[R_WS:R_WS + HIDDEN, :G * BLK_OUT],
                 preferred_element_type=f32)                                  # shortcut
    y = (xs
         + jnp.dot(net, w_ref[R_W1R:R_W1R + G * BLK_H, :G * BLK_OUT],
                   preferred_element_type=f32)
         + w_ref[R_B1R:R_B1R + 1, :G * BLK_OUT])                              # (B, 32)
    # act layer + act inside fc_out(self.act(x)) => LeakyReLU(0.2) twice = slope 0.04
    y = jnp.where(y >= 0, y, (LEAKY * LEAKY) * y)

    # ---- merged lane-dense output: rotation -> lanes [0,32), canonical_loc -> [32,56) ----
    out_ref[...] = (jnp.dot(xa, w_ref[R_WROT:R_WROT + HIDDEN, :],
                            preferred_element_type=f32)
                    + jnp.dot(y, w_ref[R_WCL:R_WCL + G * BLK_OUT, :],
                              preferred_element_type=f32)
                    + w_ref[R_BOUT:R_BOUT + 1, :])


# ----------------- parameter init & packing -----------------

def init_params(key):
    """Raw, module-layout parameters."""
    ks = jax.random.split(key, 14)
    n = lambda k, shape, s=0.1: (jax.random.normal(k, shape, jnp.float32) * s)
    return {
        # trunk conv1d: latent_dim -> hidden_size
        "w1": n(ks[0], (LATENT_DIM, HIDDEN)),
        "b1": n(ks[1], (HIDDEN,)),
        # non-const head ("rotation"): Conv1d(hidden, out_dim*groups, 1)
        "rot_w": n(ks[2], (HIDDEN, ROT_G * ROT_D)),
        "rot_b": n(ks[3], (ROT_G * ROT_D,)),
        # AttentionConstMemory (const head "canonical_loc")
        "attn_wq": n(ks[4], (MT_LATENT, G, CHD)),
        "attn_bq": n(ks[5], (G, CHD)),
        "attn_mem": n(ks[6], (G, QN, CHD)),
        # GroupWiseResnetBlockConv1d (8 -> 4 per group, hidden 4)
        "blk_w0": n(ks[7], (G, BLK_IN, BLK_H)),
        "blk_b0": n(ks[8], (G, BLK_H)),
        "blk_w1": n(ks[9], (G, BLK_H, BLK_OUT)),
        "blk_b1": n(ks[10], (G, BLK_OUT)),
        "blk_ws": n(ks[11], (G, BLK_IN, BLK_OUT)),     # shortcut, no bias
        # final grouped conv: Conv1d(4*G, 3*G, 1, groups=G)
        "cl_w": n(ks[12], (G, BLK_OUT, CL_OUT)),
        "cl_b": n(ks[13], (G, CL_OUT)),
    }


def pack_params(raw):
    """Build the single kernel-ready weight slab: block-diagonal grouped weights,
    folded query/shift chain, deferred-denominator value matrix, folded
    out_conv_scales, and all biases — one (360, 128) lane-dense f32 array."""
    f32 = jnp.float32
    blkdiag = lambda w: jax.scipy.linalg.block_diag(*[w[g] for g in range(w.shape[0])])
    rs = OUT_CONV_SCALES["rotation"]        # 0.5  (power of two -> exact fold)
    cs = OUT_CONV_SCALES["canonical_loc"]   # 2.0

    # --- attention fold: centered logits = mt @ wd + bd_bias ---
    wq_flat = raw["attn_wq"].reshape(MT_LATENT, G * CHD)           # (16, 64)
    bq_flat = raw["attn_bq"].reshape(1, G * CHD)                   # (1, 64)
    memT_bd = blkdiag(jnp.swapaxes(raw["attn_mem"], 1, 2))         # (64, 48)
    wl = (wq_flat @ memT_bd) * INV_SQRT_D                          # logits weight (16, 48)
    bl = (bq_flat @ memT_bd) * INV_SQRT_D                          # logits bias   (1, 48)
    gid = jnp.arange(GQ) // QN
    segm = (gid[:, None] == gid[None, :]).astype(f32) / QN         # per-group mean
    center = jnp.eye(GQ, dtype=f32) - segm                         # subtract group mean
    wd, bd_bias = wl @ center, bl @ center

    # --- deferred-denominator value matmul: [mem_bd | segH] (48, 128) ---
    mem_bd = blkdiag(raw["attn_mem"])                              # (48, 64)
    cid = jnp.arange(HIDDEN) // CHD
    segH = (gid[:, None] == cid[None, :]).astype(f32)              # (48, 64)
    wv = jnp.concatenate([mem_bd, segH], axis=1)                   # (48, 128)

    slab = jnp.zeros((SLAB_ROWS, OUT_LANES), f32)
    slab = slab.at[R_W1:R_W1 + LATENT_DIM, :HIDDEN].set(raw["w1"])
    slab = slab.at[R_WD:R_WD + MT_LATENT, :GQ].set(wd)
    slab = slab.at[R_WV:R_WV + GQ, :].set(wv)
    slab = slab.at[R_W0:R_W0 + HIDDEN, :G * BLK_H].set(blkdiag(raw["blk_w0"]))
    slab = slab.at[R_WS:R_WS + HIDDEN, :G * BLK_OUT].set(blkdiag(raw["blk_ws"]))
    slab = slab.at[R_W1R:R_W1R + G * BLK_H, :G * BLK_OUT].set(blkdiag(raw["blk_w1"]))
    slab = slab.at[R_WROT:R_WROT + HIDDEN, :ROT_G * ROT_D].set(raw["rot_w"] * rs)
    slab = slab.at[R_WCL:R_WCL + G * BLK_OUT,
                   ROT_G * ROT_D:ROT_G * ROT_D + G * CL_OUT].set(blkdiag(raw["cl_w"]) * cs)
    # bias rows
    slab = slab.at[R_B1, :HIDDEN].set(raw["b1"])
    slab = slab.at[R_BD, :GQ].set(bd_bias[0])
    slab = slab.at[R_B0, :G * BLK_H].set(raw["blk_b0"].reshape(-1))
    slab = slab.at[R_B1R, :G * BLK_OUT].set(raw["blk_b1"].reshape(-1))
    slab = slab.at[R_BOUT, :ROT_G * ROT_D].set(raw["rot_b"] * rs)
    slab = slab.at[R_BOUT,
                   ROT_G * ROT_D:ROT_G * ROT_D + G * CL_OUT].set((raw["cl_b"] * cs).reshape(-1))
    return slab


@jax.jit
def forward(weight_slab, inputs, motion_template_latent):
    Bx = inputs.shape[0]
    out = pl.pallas_call(
        _fused_kernel,
        out_shape=jax.ShapeDtypeStruct((Bx, OUT_LANES), jnp.float32),
        in_specs=[_vmem(), _vmem(), _vmem()],
        out_specs=_vmem(),
    )(inputs, motion_template_latent, weight_slab)
    rot = out[:, :ROT_G * ROT_D].reshape(Bx, ROT_G, ROT_D)            # scale folded
    cl = out[:, ROT_G * ROT_D:ROT_G * ROT_D + G * CL_OUT].reshape(Bx, G, CL_OUT)
    return {"rotation": rot, "canonical_loc": cl}


# ----------------- pure-JAX reference (unfolded module math) -----------------

def reference_forward(raw, inputs, mt):
    lrelu = lambda v: jnp.where(v >= 0, v, LEAKY * v)
    x = inputs @ raw["w1"] + raw["b1"]
    rot = ((lrelu(x) @ raw["rot_w"] + raw["rot_b"]) * OUT_CONV_SCALES["rotation"]
           ).reshape(-1, ROT_G, ROT_D)
    q = jnp.einsum("bl,lgc->bgc", mt, raw["attn_wq"]) + raw["attn_bq"]
    logits = jnp.einsum("bgc,gqc->bgq", q, raw["attn_mem"]) * INV_SQRT_D
    attn = jax.nn.softmax(logits, axis=-1)
    h = jnp.einsum("bgq,gqc->bgc", attn, raw["attn_mem"])
    net = jnp.maximum(jnp.einsum("bgc,gch->bgh", jnp.maximum(h, 0.0), raw["blk_w0"])
                      + raw["blk_b0"], 0.0)
    dx = jnp.einsum("bgh,gho->bgo", net, raw["blk_w1"]) + raw["blk_b1"]
    xs = jnp.einsum("bgc,gco->bgo", h, raw["blk_ws"])
    y = lrelu(lrelu(xs + dx))
    cl = (jnp.einsum("bgo,god->bgd", y, raw["cl_w"]) + raw["cl_b"]) \
        * OUT_CONV_SCALES["canonical_loc"]
    return {"rotation": rot, "canonical_loc": cl}


if __name__ == "__main__":
    key = jax.random.PRNGKey(0)
    k_param, k_in, k_mt = jax.random.split(key, 3)
    raw_params = init_params(k_param)
    weight_slab = pack_params(raw_params)

    inputs = jax.random.normal(k_in, (B, LATENT_DIM), jnp.float32)
    motion_template_latent = jax.random.normal(k_mt, (B, MT_LATENT), jnp.float32)

    out = forward(weight_slab, inputs, motion_template_latent)
    jax.block_until_ready(out)
    assert out["rotation"].shape == (B, ROT_G, ROT_D)
    assert out["canonical_loc"].shape == (B, G, CL_OUT)

    ref = reference_forward(raw_params, inputs, motion_template_latent)
    err_rot = float(jnp.max(jnp.abs(out["rotation"] - ref["rotation"])))
    err_cl = float(jnp.max(jnp.abs(out["canonical_loc"] - ref["canonical_loc"])))
    assert err_rot < 5e-2 and err_cl < 5e-2, (err_rot, err_cl)
    print("KERNEL_OK")
</pallas_src>

<mosaic_0001>
module attributes {stable_mosaic.version = 11 : i64} {
  func.func @_fused_kernel(%arg0: memref<2x32xf32, #tpu.memory_space<vmem>>, %arg1: memref<2x16xf32, #tpu.memory_space<vmem>>, %arg2: memref<360x128xf32, #tpu.memory_space<vmem>>, %arg3: memref<2x128xf32, #tpu.memory_space<vmem>>) attributes {dimension_semantics = [], scalar_prefetch = 0 : i64, scratch_operands = 0 : i64, tpu.core_type = #tpu.core_type<tc>} {
    %c0 = arith.constant 0 : index
    %c0_0 = arith.constant 0 : index
    %0 = vector.load %arg0[%c0, %c0_0] : memref<2x32xf32, #tpu.memory_space<vmem>>, vector<2x32xf32>
    %c0_1 = arith.constant 0 : index
    %c0_2 = arith.constant 0 : index
    %1 = vector.load %arg2[%c0_1, %c0_2] : memref<360x128xf32, #tpu.memory_space<vmem>>, vector<32x64xf32>
    %cst = arith.constant dense<0.000000e+00> : vector<2x64xf32>
    %2 = tpu.matmul %0, %1, %cst {dimension_numbers = #tpu.dot_dimension_numbers<[1], [0], [0], [1], [0, 0, 1, 1], [], []>} : vector<2x32xf32>, vector<32x64xf32>, vector<2x64xf32> -> vector<2x64xf32>
    %c352 = arith.constant 352 : index
    %c0_3 = arith.constant 0 : index
    %3 = vector.load %arg2[%c352, %c0_3] : memref<360x128xf32, #tpu.memory_space<vmem>>, vector<1x64xf32>
    %4 = vector.broadcast %3 : vector<1x64xf32> to vector<2x64xf32>
    %5 = arith.addf %2, %4 : vector<2x64xf32>
    %cst_4 = arith.constant 0.000000e+00 : f32
    %6 = vector.broadcast %cst_4 : f32 to vector<2x64xf32>
    %7 = arith.cmpf oge, %5, %6 : vector<2x64xf32>
    %cst_5 = arith.constant 2.000000e-01 : f32
    %8 = vector.broadcast %cst_5 : f32 to vector<2x64xf32>
    %9 = arith.mulf %8, %5 : vector<2x64xf32>
    %10 = arith.select %7, %5, %9 : vector<2x64xi1>, vector<2x64xf32>
    %c0_6 = arith.constant 0 : index
    %c0_7 = arith.constant 0 : index
    %11 = vector.load %arg1[%c0_6, %c0_7] : memref<2x16xf32, #tpu.memory_space<vmem>>, vector<2x16xf32>
    %c32 = arith.constant 32 : index
    %c0_8 = arith.constant 0 : index
    %12 = vector.load %arg2[%c32, %c0_8] : memref<360x128xf32, #tpu.memory_space<vmem>>, vector<16x48xf32>
    %cst_9 = arith.constant dense<0.000000e+00> : vector<2x48xf32>
    %13 = tpu.matmul %11, %12, %cst_9 {dimension_numbers = #tpu.dot_dimension_numbers<[1], [0], [0], [1], [0, 0, 1, 1], [], []>} : vector<2x16xf32>, vector<16x48xf32>, vector<2x48xf32> -> vector<2x48xf32>
    %c353 = arith.constant 353 : index
    %c0_10 = arith.constant 0 : index
    %14 = vector.load %arg2[%c353, %c0_10] : memref<360x128xf32, #tpu.memory_space<vmem>>, vector<1x48xf32>
    %15 = vector.broadcast %14 : vector<1x48xf32> to vector<2x48xf32>
    %16 = arith.addf %13, %15 : vector<2x48xf32>
    %17 = math.exp %16 : vector<2x48xf32>
    %c48 = arith.constant 48 : index
    %c0_11 = arith.constant 0 : index
    %18 = vector.load %arg2[%c48, %c0_11] : memref<360x128xf32, #tpu.memory_space<vmem>>, vector<48x128xf32>
    %cst_12 = arith.constant dense<0.000000e+00> : vector<2x128xf32>
    %19 = tpu.matmul %17, %18, %cst_12 {dimension_numbers = #tpu.dot_dimension_numbers<[1], [0], [0], [1], [0, 0, 1, 1], [], []>} : vector<2x48xf32>, vector<48x128xf32>, vector<2x128xf32> -> vector<2x128xf32>
    %20 = vector.extract_strided_slice %19 {offsets = [0, 0], sizes = [2, 64], strides = [1, 1]} : vector<2x128xf32> to vector<2x64xf32>
    %21 = vector.extract_strided_slice %19 {offsets = [0, 64], sizes = [2, 64], strides = [1, 1]} : vector<2x128xf32> to vector<2x64xf32>
    %22 = tpu.reciprocal %21 {approx = true} : vector<2x64xf32> -> vector<2x64xf32>
    %23 = arith.mulf %20, %22 : vector<2x64xf32>
    %cst_13 = arith.constant 0.000000e+00 : f32
    %24 = vector.broadcast %cst_13 : f32 to vector<2x64xf32>
    %25 = arith.maximumf %23, %24 : vector<2x64xf32>
    %c96 = arith.constant 96 : index
    %c0_14 = arith.constant 0 : index
    %26 = vector.load %arg2[%c96, %c0_14] : memref<360x128xf32, #tpu.memory_space<vmem>>, vector<64x32xf32>
    %cst_15 = arith.constant dense<0.000000e+00> : vector<2x32xf32>
    %27 = tpu.matmul %25, %26, %cst_15 {dimension_numbers = #tpu.dot_dimension_numbers<[1], [0], [0], [1], [0, 0, 1, 1], [], []>} : vector<2x64xf32>, vector<64x32xf32>, vector<2x32xf32> -> vector<2x32xf32>
    %c354 = arith.constant 354 : index
    %c0_16 = arith.constant 0 : index
    %28 = vector.load %arg2[%c354, %c0_16] : memref<360x128xf32, #tpu.memory_space<vmem>>, vector<1x32xf32>
    %29 = vector.broadcast %28 : vector<1x32xf32> to vector<2x32xf32>
    %30 = arith.addf %27, %29 : vector<2x32xf32>
    %cst_17 = arith.constant 0.000000e+00 : f32
    %31 = vector.broadcast %cst_17 : f32 to vector<2x32xf32>
    %32 = arith.maximumf %30, %31 : vector<2x32xf32>
    %c160 = arith.constant 160 : index
    %c0_18 = arith.constant 0 : index
    %33 = vector.load %arg2[%c160, %c0_18] : memref<360x128xf32, #tpu.memory_space<vmem>>, vector<64x32xf32>
    %cst_19 = arith.constant dense<0.000000e+00> : vector<2x32xf32>
    %34 = tpu.matmul %23, %33, %cst_19 {dimension_numbers = #tpu.dot_dimension_numbers<[1], [0], [0], [1], [0, 0, 1, 1], [], []>} : vector<2x64xf32>, vector<64x32xf32>, vector<2x32xf32> -> vector<2x32xf32>
    %c224 = arith.constant 224 : index
    %c0_20 = arith.constant 0 : index
    %35 = vector.load %arg2[%c224, %c0_20] : memref<360x128xf32, #tpu.memory_space<vmem>>, vector<32x32xf32>
    %cst_21 = arith.constant dense<0.000000e+00> : vector<2x32xf32>
    %36 = tpu.matmul %32, %35, %cst_21 {dimension_numbers = #tpu.dot_dimension_numbers<[1], [0], [0], [1], [0, 0, 1, 1], [], []>} : vector<2x32xf32>, vector<32x32xf32>, vector<2x32xf32> -> vector<2x32xf32>
    %37 = arith.addf %34, %36 : vector<2x32xf32>
    %c355 = arith.constant 355 : index
    %c0_22 = arith.constant 0 : index
    %38 = vector.load %arg2[%c355, %c0_22] : memref<360x128xf32, #tpu.memory_space<vmem>>, vector<1x32xf32>
    %39 = vector.broadcast %38 : vector<1x32xf32> to vector<2x32xf32>
    %40 = arith.addf %37, %39 : vector<2x32xf32>
    %cst_23 = arith.constant 0.000000e+00 : f32
    %41 = vector.broadcast %cst_23 : f32 to vector<2x32xf32>
    %42 = arith.cmpf oge, %40, %41 : vector<2x32xf32>
    %cst_24 = arith.constant 4.000000e-02 : f32
    %43 = vector.broadcast %cst_24 : f32 to vector<2x32xf32>
    %44 = arith.mulf %43, %40 : vector<2x32xf32>
    %45 = arith.select %42, %40, %44 : vector<2x32xi1>, vector<2x32xf32>
    %c256 = arith.constant 256 : index
    %c0_25 = arith.constant 0 : index
    %46 = vector.load %arg2[%c256, %c0_25] : memref<360x128xf32, #tpu.memory_space<vmem>>, vector<64x128xf32>
    %cst_26 = arith.constant dense<0.000000e+00> : vector<2x128xf32>
    %47 = tpu.matmul %10, %46, %cst_26 {dimension_numbers = #tpu.dot_dimension_numbers<[1], [0], [0], [1], [0, 0, 1, 1], [], []>} : vector<2x64xf32>, vector<64x128xf32>, vector<2x128xf32> -> vector<2x128xf32>
    %c320 = arith.constant 320 : index
    %c0_27 = arith.constant 0 : index
    %48 = vector.load %arg2[%c320, %c0_27] : memref<360x128xf32, #tpu.memory_space<vmem>>, vector<32x128xf32>
    %cst_28 = arith.constant dense<0.000000e+00> : vector<2x128xf32>
    %49 = tpu.matmul %45, %48, %cst_28 {dimension_numbers = #tpu.dot_dimension_numbers<[1], [0], [0], [1], [0, 0, 1, 1], [], []>} : vector<2x32xf32>, vector<32x128xf32>, vector<2x128xf32> -> vector<2x128xf32>
    %50 = arith.addf %47, %49 : vector<2x128xf32>
    %c356 = arith.constant 356 : index
    %c0_29 = arith.constant 0 : index
    %51 = vector.load %arg2[%c356, %c0_29] : memref<360x128xf32, #tpu.memory_space<vmem>>, vector<1x128xf32>
    %52 = vector.broadcast %51 : vector<1x128xf32> to vector<2x128xf32>
    %53 = arith.addf %50, %52 : vector<2x128xf32>
    %c0_30 = arith.constant 0 : index
    %c0_31 = arith.constant 0 : index
    %54 = vector.load %arg3[%c0_30, %c0_31] : memref<2x128xf32, #tpu.memory_space<vmem>>, vector<2x128xf32>
    tpu.vector_store %arg3[%c0_30, %c0_31], %53 {strides = array<i32>} : memref<2x128xf32, #tpu.memory_space<vmem>>, vector<2x128xf32>,
    return
  }
}

</mosaic_0001>

<llo_original>
// kernel: forward.1
$region0: #{forward.1}
  #allocation0 [shape = 'u32[]', space=smem, size = 0x4, offset = 0x4, fixed_abs, tag = 'smem constant byte address 0x4 - core index']
  #allocation1 [shape = 'u32[72,128]{1,0:T(1,128)}', space=vmem, size = 0x9000, scoped, tag = 'internal scratch']
  %s0 = inlined_call_operand.hbm [shape: f32[2,32], index: 0, kind: input, shape index: {}]
  %s1 = inlined_call_operand.hbm [shape: f32[2,16], index: 1, kind: input, shape index: {}]
  %s2 = inlined_call_operand.hbm [shape: f32[360,128], index: 2, kind: input, shape index: {}]
  %s3 = inlined_call_operand.vmem [shape: f32[2,128], index: 3, kind: output, shape index: {}]
  %s4 = sld [smem:[#allocation0]]
  $region34: #{forward.1} parent=0
    _
  %s6 = ssub.s32 1, %s4
  %s7 = scalar_select 0, %s6, %s4
  $region1: #{forward.1} parent=0
    #allocation2 [shape = 'u8[1024]{0}', space=vmem, size = 0x400, scoped, tag = 'input window, operand 0, single buffered']
    #allocation3 [shape = 's32[1]{0}', space=sflag, size = 0x4, scoped, tag = 'scoped memory for forward.1']
    #allocation4 [shape = 'u8[1024]{0}', space=vmem, size = 0x400, scoped, tag = 'input window, operand 1, single buffered']
    #allocation5 [shape = 's32[1]{0}', space=sflag, size = 0x4, scoped, tag = 'scoped memory for forward.1']
    #allocation6 [shape = 'u8[184320]{0}', space=vmem, size = 0x2d000, scoped, tag = 'input window, operand 2, single buffered']
    %8 = vsyncpa [#allocation3], 0
    %9 = vsyncpa [#allocation5], 0
    // Predicated region
    $region2: #{forward.1} parent=1 // pred_check
      _
    $region3: #{forward.1} parent=1 // pred_check_branch
      %11 = sbr.rel (0) target = $region5
    $region4: #{forward.1} parent=1 // pred_region
      %13 = vsyncadd [#allocation3], 0
      %s15 = sshll.u32 %s0, 4
      %s16 = int_to_ptr.hbm [resolvable:$true] %s15
      %s17 = sshll.u32 [#allocation2], 4
      %s18 = int_to_ptr.vmem [resolvable:$true] %s17
      %20 = dma.hbm_to_vmem [thread:$0]  %s16, 32, %s18, [#allocation3]
    $region5: #{forward.1} parent=1 // pred_fallthru
      _
    // Predicated region
    $region6: #{forward.1} parent=1 // pred_check
      _
    $region7: #{forward.1} parent=1 // pred_check_branch
      %22 = sbr.rel (0) target = $region9
    $region8: #{forward.1} parent=1 // pred_region
      %24 = vsyncadd [#allocation5], 0
      %s26 = sshll.u32 %s1, 4
      %s27 = int_to_ptr.hbm [resolvable:$true] %s26
      %s28 = sshll.u32 [#allocation4], 4
      %s29 = int_to_ptr.vmem [resolvable:$true] %s28
      %31 = dma.hbm_to_vmem [thread:$0]  %s27, 32, %s29, [#allocation5]
    $region9: #{forward.1} parent=1 // pred_fallthru
      _
    // Predicated region
    $region10: #{forward.1} parent=1 // pred_check
      _
    $region11: #{forward.1} parent=1 // pred_check_branch
      %33 = sbr.rel (0) target = $region13
    $region12: #{forward.1} parent=1 // pred_region
      %35 = vsyncadd [#allocation5], 0
      %s36 = sshll.u32 %s2, 4
      %s37 = int_to_ptr.hbm [resolvable:$true] %s36
      %s38 = sshll.u32 [#allocation6], 4
      %s39 = int_to_ptr.vmem [resolvable:$true] %s38
      %44 = dma.hbm_to_vmem [thread:$0]  %s37, 5760, %s39, [#allocation5], 128, 128, 8
    $region13: #{forward.1} parent=1 // pred_fallthru
      _
    // Predicated region
    $region14: #{forward.1} parent=1 // pred_check
      _
    $region15: #{forward.1} parent=1 // pred_check_branch
      %46 = sbr.rel (0) target = $region17
    $region16: #{forward.1} parent=1 // pred_region
      %48 = dma.done [#allocation3], 32
    $region17: #{forward.1} parent=1 // pred_fallthru
      _
    // Predicated region
    $region18: #{forward.1} parent=1 // pred_check
      _
    $region19: #{forward.1} parent=1 // pred_check_branch
      %50 = sbr.rel (0) target = $region21
    $region20: #{forward.1} parent=1 // pred_region
      %52 = dma.done [#allocation5], 32
    $region21: #{forward.1} parent=1 // pred_fallthru
      _
    // Predicated region
    $region22: #{forward.1} parent=1 // pred_check
      _
    $region23: #{forward.1} parent=1 // pred_check_branch
      %54 = sbr.rel (0) target = $region25
    $region24: #{forward.1} parent=1 // pred_region
      %56 = dma.done [#allocation5], 5760
    $region25: #{forward.1} parent=1 // pred_fallthru
      _
    %v57 = vld [vmem:[#allocation2] sm:$0x3]
    %v58 = vld [vmem:[#allocation6] sm:$0xff]
    %v59 = vld [vmem:[#allocation6 + $0x8] sm:$0xff]
    %v60 = vld [vmem:[#allocation6 + $0x10] sm:$0xff]
    %v61 = vld [vmem:[#allocation6 + $0x18] sm:$0xff]
    %v62 = vld [vmem:[#allocation6 + $0x160] sm:$0x1]
    %v63 = vperm.slane %v62, 0
    %vm64 = vcmask 261120
    %v66 = vsel %vm64, %v57, 0
    %68 = vmatpush.msra.mxu0 0.0
    %69 = vmatpush.msra.mxu0 0.0
    %70 = vmatpush.msra.mxu0 0.0
    %71 = vmatpush.msra.mxu0 0.0
    %72 = vmatpush.msra.mxu0 0.0
    %73 = vmatpush.msra.mxu0 0.0
    %74 = vmatpush.msra.mxu0 0.0
    %75 = vmatpush.msra.mxu0 0.0
    %76 = vmatpush.msra.mxu0 0.0
    %77 = vmatpush.msra.mxu0 0.0
    %78 = vmatpush.msra.mxu0 0.0
    %79 = vmatpush.msra.mxu0 0.0
    %80 = vmatpush.msra.mxu0 %v61
    %81 = vmatpush.msra.mxu0 %v60
    %82 = vmatpush.msra.mxu0 %v59
    %83 = vmatpush.msra.mxu0 %v58
    %84 = vmatmul.f32.gmra.mxu0 %v66
    %v85 = vpop.f32.mrf.mxu0
    %v86 = vadd.f32 %v63, %v85
    %87 = vdwg.mxu0
    %vm88 = vcmp.ge.f32.partialorder %v86, 0.0
    %v89 = vmul.f32 %v86, 0.2
    %v90 = vsel %vm88, %v86, %v89
    %v91 = vld [vmem:[#allocation4] sm:$0x3]
    %v92 = vld [vmem:[#allocation6 + $0x20] sm:$0xff]
    %v93 = vld [vmem:[#allocation6 + $0x28] sm:$0xff]
    %v94 = vld [vmem:[#allocation6 + $0x161] sm:$0x1]
    %v95 = vperm.slane %v94, 0
    %vm96 = vcmask 130048
    %v98 = vsel %vm96, %v91, 0
    %100 = vmatpush.msra.mxu0 0.0
    %101 = vmatpush.msra.mxu0 0.0
    %102 = vmatpush.msra.mxu0 0.0
    %103 = vmatpush.msra.mxu0 0.0
    %104 = vmatpush.msra.mxu0 0.0
    %105 = vmatpush.msra.mxu0 0.0
    %106 = vmatpush.msra.mxu0 0.0
    %107 = vmatpush.msra.mxu0 0.0
    %108 = vmatpush.msra.mxu0 0.0
    %109 = vmatpush.msra.mxu0 0.0
    %110 = vmatpush.msra.mxu0 0.0
    %111 = vmatpush.msra.mxu0 0.0
    %112 = vmatpush.msra.mxu0 0.0
    %113 = vmatpush.msra.mxu0 0.0
    %114 = vmatpush.msra.mxu0 %v93
    %115 = vmatpush.msra.mxu0 %v92
    %116 = vmatmul.f32.gmra.mxu0 %v98
    %v117 = vpop.f32.mrf.mxu0
    %v118 = vadd.f32 %v95, %v117
    %119 = vdwg.mxu0
    %v120 = vmul.f32 %v118, 1.442695
    %v121 = vpow.pop %v120
    %v122 = vld [vmem:[#allocation6 + $0x30] sm:$0xff]
    %v123 = vld [vmem:[#allocation6 + $0x38] sm:$0xff]
    %v124 = vld [vmem:[#allocation6 + $0x40] sm:$0xff]
    %v125 = vld [vmem:[#allocation6 + $0x48] sm:$0xff]
    %v126 = vld [vmem:[#allocation6 + $0x50] sm:$0xff]
    %v127 = vld [vmem:[#allocation6 + $0x58] sm:$0xff]
    %vm128 = vcmask 392192
    %v130 = vsel %vm128, %v121, 0
    %132 = vmatpush.msra.mxu0 0.0
    %133 = vmatpush.msra.mxu0 0.0
    %134 = vmatpush.msra.mxu0 0.0
    %135 = vmatpush.msra.mxu0 0.0
    %136 = vmatpush.msra.mxu0 0.0
    %137 = vmatpush.msra.mxu0 0.0
    %138 = vmatpush.msra.mxu0 0.0
    %139 = vmatpush.msra.mxu0 0.0
    %140 = vmatpush.msra.mxu0 0.0
    %141 = vmatpush.msra.mxu0 0.0
    %142 = vmatpush.msra.mxu0 %v127
    %143 = vmatpush.msra.mxu0 %v126
    %144 = vmatpush.msra.mxu0 %v125
    %145 = vmatpush.msra.mxu0 %v124
    %146 = vmatpush.msra.mxu0 %v123
    %147 = vmatpush.msra.mxu0 %v122
    %148 = vmatmul.f32.gmra.mxu0 %v130
    %v149 = vpop.f32.mrf.mxu0
    %v150 = vadd.f32 0.0, %v149
    %151 = vdwg.mxu0
    %v152 = vrcp.pop %v150
    %154 = vrot.lane.b32.xlu0 %v152, 64
    %v155 = vpop.permute.xlu0 %154
    %v157 = vmul.f32 %v150, %v155
    %v158 = vmax.f32 %v157, 0.0
    %v159 = vld [vmem:[#allocation6 + $0x60] sm:$0xff]
    %v160 = vld [vmem:[#allocation6 + $0x68] sm:$0xff]
    %v161 = vld [vmem:[#allocation6 + $0x70] sm:$0xff]
    %v162 = vld [vmem:[#allocation6 + $0x78] sm:$0xff]
    %v163 = vld [vmem:[#allocation6 + $0x80] sm:$0xff]
    %v164 = vld [vmem:[#allocation6 + $0x88] sm:$0xff]
    %v165 = vld [vmem:[#allocation6 + $0x90] sm:$0xff]
    %v166 = vld [vmem:[#allocation6 + $0x98] sm:$0xff]
    %v167 = vld [vmem:[#allocation6 + $0x162] sm:$0x1]
    %v168 = vperm.slane %v167, 0
    %vm169 = vcmask 523264
    %v171 = vsel %vm169, %v158, 0
    %173 = vmatpush.msra.mxu0 0.0
    %174 = vmatpush.msra.mxu0 0.0
    %175 = vmatpush.msra.mxu0 0.0
    %176 = vmatpush.msra.mxu0 0.0
    %177 = vmatpush.msra.mxu0 0.0
    %178 = vmatpush.msra.mxu0 0.0
    %179 = vmatpush.msra.mxu0 0.0
    %180 = vmatpush.msra.mxu0 0.0
    %181 = vmatpush.msra.mxu0 %v166
    %182 = vmatpush.msra.mxu0 %v165
    %183 = vmatpush.msra.mxu0 %v164
    %184 = vmatpush.msra.mxu0 %v163
    %185 = vmatpush.msra.mxu0 %v162
    %186 = vmatpush.msra.mxu0 %v161
    %187 = vmatpush.msra.mxu0 %v160
    %188 = vmatpush.msra.mxu0 %v159
    %189 = vmatmul.f32.gmra.mxu0 %v171
    %v190 = vpop.f32.mrf.mxu0
    %v191 = vadd.f32 %v168, %v190
    %192 = vdwg.mxu0
    %v193 = vmax.f32 %v191, 0.0
    %v194 = vld [vmem:[#allocation6 + $0xa0] sm:$0xff]
    %v195 = vld [vmem:[#allocation6 + $0xa8] sm:$0xff]
    %v196 = vld [vmem:[#allocation6 + $0xb0] sm:$0xff]
    %v197 = vld [vmem:[#allocation6 + $0xb8] sm:$0xff]
    %v198 = vld [vmem:[#allocation6 + $0xc0] sm:$0xff]
    %v199 = vld [vmem:[#allocation6 + $0xc8] sm:$0xff]
    %v200 = vld [vmem:[#allocation6 + $0xd0] sm:$0xff]
    %v201 = vld [vmem:[#allocation6 + $0xd8] sm:$0xff]
    %v202 = vld [vmem:[#allocation6 + $0xe0] sm:$0xff]
    %v203 = vld [vmem:[#allocation6 + $0xe8] sm:$0xff]
    %v204 = vld [vmem:[#allocation6 + $0xf0] sm:$0xff]
    %v205 = vld [vmem:[#allocation6 + $0xf8] sm:$0xff]
    %v207 = vsel %vm64, %v193, 0
    %209 = vmatpush.msra.mxu0 0.0
    %210 = vmatpush.msra.mxu0 0.0
    %211 = vmatpush.msra.mxu0 0.0
    %212 = vmatpush.msra.mxu0 0.0
    %213 = vmatpush.msra.mxu0 0.0
    %214 = vmatpush.msra.mxu0 0.0
    %215 = vmatpush.msra.mxu0 0.0
    %216 = vmatpush.msra.mxu0 0.0
    %217 = vmatpush.msra.mxu0 0.0
    %218 = vmatpush.msra.mxu0 0.0
    %219 = vmatpush.msra.mxu0 0.0
    %220 = vmatpush.msra.mxu0 0.0
    %221 = vmatpush.msra.mxu0 %v205
    %222 = vmatpush.msra.mxu0 %v204
    %223 = vmatpush.msra.mxu0 %v203
    %224 = vmatpush.msra.mxu0 %v202
    %225 = vmatmul.f32.gmra.mxu0 %v207
    %v226 = vpop.f32.mrf.mxu0
    %v227 = vadd.f32 0.0, %v226
    %228 = vdwg.mxu0
    %v230 = vsel %vm169, %v157, 0
    %232 = vmatpush.msra.mxu0 0.0
    %233 = vmatpush.msra.mxu0 0.0
    %234 = vmatpush.msra.mxu0 0.0
    %235 = vmatpush.msra.mxu0 0.0
    %236 = vmatpush.msra.mxu0 0.0
    %237 = vmatpush.msra.mxu0 0.0
    %238 = vmatpush.msra.mxu0 0.0
    %239 = vmatpush.msra.mxu0 0.0
    %240 = vmatpush.msra.mxu0 %v201
    %241 = vmatpush.msra.mxu0 %v200
    %242 = vmatpush.msra.mxu0 %v199
    %243 = vmatpush.msra.mxu0 %v198
    %244 = vmatpush.msra.mxu0 %v197
    %245 = vmatpush.msra.mxu0 %v196
    %246 = vmatpush.msra.mxu0 %v195
    %247 = vmatpush.msra.mxu0 %v194
    %248 = vmatmul.f32.gmra.mxu0 %v230
    %v249 = vpop.f32.mrf.mxu0
    %v250 = vadd.f32 %v227, %v249
    %251 = vdwg.mxu0
    %v252 = vld [vmem:[#allocation6 + $0x163] sm:$0x1]
    %v253 = vperm.slane %v252, 0
    %v254 = vadd.f32 %v250, %v253
    %vm255 = vcmp.ge.f32.partialorder %v254, 0.0
    %v256 = vmul.f32 %v254, 0.04
    %v257 = vsel %vm255, %v254, %v256
    %v258 = vld [vmem:[#allocation6 + $0x100] sm:$0xff]
    %v259 = vld [vmem:[#allocation6 + $0x108] sm:$0xff]
    %v260 = vld [vmem:[#allocation6 + $0x110] sm:$0xff]
    %v261 = vld [vmem:[#allocation6 + $0x118] sm:$0xff]
    %v262 = vld [vmem:[#allocation6 + $0x120] sm:$0xff]
    %v263 = vld [vmem:[#allocation6 + $0x128] sm:$0xff]
    %v264 = vld [vmem:[#allocation6 + $0x130] sm:$0xff]
    %v265 = vld [vmem:[#allocation6 + $0x138] sm:$0xff]
    %v266 = vld [vmem:[#allocation6 + $0x140] sm:$0xff]
    %v267 = vld [vmem:[#allocation6 + $0x148] sm:$0xff]
    %v268 = vld [vmem:[#allocation6 + $0x150] sm:$0xff]
    %v269 = vld [vmem:[#allocation6 + $0x158] sm:$0xff]
    %v271 = vsel %vm64, %v257, 0
    %273 = vmatpush.msra.mxu0 0.0
    %274 = vmatpush.msra.mxu0 0.0
    %275 = vmatpush.msra.mxu0 0.0
    %276 = vmatpush.msra.mxu0 0.0
    %277 = vmatpush.msra.mxu0 0.0
    %278 = vmatpush.msra.mxu0 0.0
    %279 = vmatpush.msra.mxu0 0.0
    %280 = vmatpush.msra.mxu0 0.0
    %281 = vmatpush.msra.mxu0 0.0
    %282 = vmatpush.msra.mxu0 0.0
    %283 = vmatpush.msra.mxu0 0.0
    %284 = vmatpush.msra.mxu0 0.0
    %285 = vmatpush.msra.mxu0 %v269
    %286 = vmatpush.msra.mxu0 %v268
    %287 = vmatpush.msra.mxu0 %v267
    %288 = vmatpush.msra.mxu0 %v266
    %289 = vmatmul.f32.gmra.mxu0 %v271
    %v290 = vpop.f32.mrf.mxu0
    %v291 = vadd.f32 0.0, %v290
    %292 = vdwg.mxu0
    %v294 = vsel %vm169, %v90, 0
    %296 = vmatpush.msra.mxu0 0.0
    %297 = vmatpush.msra.mxu0 0.0
    %298 = vmatpush.msra.mxu0 0.0
    %299 = vmatpush.msra.mxu0 0.0
    %300 = vmatpush.msra.mxu0 0.0
    %301 = vmatpush.msra.mxu0 0.0
    %302 = vmatpush.msra.mxu0 0.0
    %303 = vmatpush.msra.mxu0 0.0
    %304 = vmatpush.msra.mxu0 %v265
    %305 = vmatpush.msra.mxu0 %v264
    %306 = vmatpush.msra.mxu0 %v263
    %307 = vmatpush.msra.mxu0 %v262
    %308 = vmatpush.msra.mxu0 %v261
    %309 = vmatpush.msra.mxu0 %v260
    %310 = vmatpush.msra.mxu0 %v259
    %311 = vmatpush.msra.mxu0 %v258
    %312 = vmatmul.f32.gmra.mxu0 %v294
    %v313 = vpop.f32.mrf.mxu0
    %v314 = vadd.f32 %v291, %v313
    %315 = vdwg.mxu0
    %v316 = vld [vmem:[#allocation6 + $0x164] sm:$0x1]
    %v317 = vperm.slane %v316, 0
    %v318 = vadd.f32 %v314, %v317
    %319 = vst [vmem:[%s3] sm:$0x3] %v318
    // Predicated region
    $region26: #{forward.1} parent=1 // pred_check
      _
    $region27: #{forward.1} parent=1 // pred_check_branch
      %321 = sbr.rel (0) target = $region29
    $region28: #{forward.1} parent=1 // pred_region
      _
    $region29: #{forward.1} parent=1 // pred_fallthru
      _
    // Predicated region
    $region30: #{forward.1} parent=1 // pred_check
      _
    $region31: #{forward.1} parent=1 // pred_check_branch
      %323 = sbr.rel (0) target = $region33
    $region32: #{forward.1} parent=1 // pred_region
      _
    $region33: #{forward.1} parent=1 // pred_fallthru
      _
    %324 = vsyncpa [#allocation3], 1
    %325 = vsyncpa [#allocation5], 1

</llo_original>
